<compile_context>
chip_gen: v6e
topology: v6e:2x2x1
jax: 0.10.0
libtpu: 0.0.40
codegen_flags: <defaults>
</compile_context>

<pallas_src>
import functools

import jax
import jax.numpy as jnp
from jax.experimental import pallas as pl
from jax.experimental.pallas import tpu as pltpu

_LANE = 128     # inner feature dims padded to multiples of this (lane width)
_SUBLANE = 8    # f32 sublane count: batch tiles padded to multiples of this


def _round_up(n, m):
    return (n + m - 1) // m * m


def _leaky_relu(x, slope=0.2):
    return jnp.where(x > 0, x, slope * x)


def generator_kernel(x_ref,
                     w1_ref, b1_ref,
                     w2_ref, b2_ref,
                     w3_ref, b3_ref,
                     w4_ref, b4_ref,
                     o_ref,
                     *, tanh_in_bf16=False):
    # Hoist bias loads (f32) so each is read/broadcast once per tile.
    b1 = b1_ref[...]
    b2 = b2_ref[...]
    b3 = b3_ref[...]
    b4 = b4_ref[...]

    x = x_ref[...]

    # fc1 + leaky_relu(0.2)   (dropout == identity in eval mode)
    h = jnp.dot(x.astype(w1_ref.dtype), w1_ref[...],
                preferred_element_type=jnp.float32)
    h = _leaky_relu(h + b1)

    # fc2 + leaky_relu(0.2)
    h = jnp.dot(h.astype(w2_ref.dtype), w2_ref[...],
                preferred_element_type=jnp.float32)
    h = _leaky_relu(h + b2)

    # fc3 + leaky_relu(0.2)
    h = jnp.dot(h.astype(w3_ref.dtype), w3_ref[...],
                preferred_element_type=jnp.float32)
    h = _leaky_relu(h + b3)

    # fc4 + tanh  (output width is unpadded: o_ref already has output_size lanes)
    h = jnp.dot(h.astype(w4_ref.dtype), w4_ref[...],
                preferred_element_type=jnp.float32)
    h = h + b4
    if tanh_in_bf16:
        # Opt-in (v7x, bf16 output): halves EUP tanh cost if it ever binds.
        h = h.astype(jnp.bfloat16)
    o_ref[...] = jnp.tanh(h).astype(o_ref.dtype)


def pad_params(params, param_dtype=jnp.float32):
    """Zero-pad inner feature dims to multiples of 128 (once, not per call).

    * Weights are cast to `param_dtype`.  bf16 is a good choice on *all*
      generations (v5e's MXU is natively bf16): half the DMA/VMEM bytes.
    * Biases stay f32 so the bias/leaky_relu/tanh epilogue runs on the f32
      VPU/EUP path (v5e has no bf16 elementwise units).
    * The last layer's output dim is left UNPADDED so the kernel writes the
      true output width directly (no wasted writeback bytes, no post slice).
    """
    padded = {}
    for i in range(1, 5):
        w = params[f"w{i}"]
        b = params[f"b{i}"]
        din, dout = w.shape
        din_p = _round_up(din, _LANE)
        dout_p = dout if i == 4 else _round_up(dout, _LANE)
        padded[f"w{i}"] = jnp.pad(
            w, ((0, din_p - din), (0, dout_p - dout))).astype(param_dtype)
        padded[f"b{i}"] = jnp.pad(
            b, ((0, 0), (0, dout_p - dout))).astype(jnp.float32)
    return padded


def generator_forward(x, padded_params, *, block_b=512,
                      out_dtype=jnp.float32, tanh_in_bf16=False):
    """x: (B, input_size).  padded_params: output of pad_params."""
    B, d_in = x.shape
    p = padded_params
    d_in_p = p["w1"].shape[0]
    d_out = p["w4"].shape[1]        # unpadded output width, written directly
    w_dtype = p["w1"].dtype

    # --- batch tile / grid policy ------------------------------------------
    # Truly tiny batches: one block (per-grid-step overhead would dominate).
    # Otherwise: >=2 grid steps so v7x's 2 TensorCores are both used, with the
    # tile right-sized to the batch (avoids huge padded-row writeback).
    if B <= 4 * _SUBLANE:
        tile_b = _round_up(max(B, _SUBLANE), _SUBLANE)
    else:
        n_steps = max(2, pl.cdiv(B, block_b))
        tile_b = _round_up(pl.cdiv(B, n_steps), _SUBLANE)
    grid_b = pl.cdiv(B, tile_b)
    B_pad = grid_b * tile_b

    if (B_pad, d_in_p) != (B, d_in):
        x = jnp.pad(x, ((0, B_pad - B), (0, d_in_p - d_in)))
    if x.dtype != w_dtype:
        # Cast once in the wrapper (halves x DMA for bf16 params; removes the
        # per-tile f32->bf16 VPU cast from every grid step).
        x = x.astype(w_dtype)

    # Advisory cost estimate so XLA schedules/overlaps the call sensibly.
    layer_shapes = [p[f"w{i}"].shape for i in range(1, 5)]
    flops = 2 * B_pad * sum(di * do for di, do in layer_shapes)
    bytes_accessed = (
        x.size * x.dtype.itemsize
        + sum(p[f"w{i}"].size * p[f"w{i}"].dtype.itemsize
              + p[f"b{i}"].size * p[f"b{i}"].dtype.itemsize
              for i in range(1, 5))
        + B_pad * d_out * jnp.dtype(out_dtype).itemsize)

    act_map = lambda i: (i, 0)     # batch-tiled activations / output
    const_map = lambda i: (0, 0)   # weights/biases stay VMEM-resident
    # NOTE: at real model sizes on v7x (64 MiB VMEM), consider
    # pipeline_mode=pl.Buffered(1) on the constant specs so the pipeliner does
    # not double-buffer VMEM-resident weights.  Irrelevant at these dims.

    in_specs = [pl.BlockSpec((tile_b, d_in_p), act_map)]
    args = [x]
    for i in range(1, 5):
        w, b = p[f"w{i}"], p[f"b{i}"]
        in_specs.append(pl.BlockSpec(w.shape, const_map))
        in_specs.append(pl.BlockSpec(b.shape, const_map))
        args.append(w)
        args.append(b)

    kernel = functools.partial(generator_kernel, tanh_in_bf16=tanh_in_bf16)

    out = pl.pallas_call(
        kernel,
        out_shape=jax.ShapeDtypeStruct((B_pad, d_out), out_dtype),
        grid=(grid_b,),
        in_specs=in_specs,
        out_specs=pl.BlockSpec((tile_b, d_out), act_map),
        compiler_params=pltpu.CompilerParams(
            dimension_semantics=("parallel",)),
        cost_estimate=pl.CostEstimate(
            flops=flops,
            transcendentals=B_pad * d_out,
            bytes_accessed=bytes_accessed),
    )(*args)

    if B_pad != B:
        out = out[:B]          # strip padded batch rows only (no lane slice)
    return out


def init_params(key, input_size, hidden_dim, output_size):
    """Deterministic parameter init. Weights stored as (in, out)."""
    dims = [(input_size, hidden_dim),
            (hidden_dim, hidden_dim * 2),
            (hidden_dim * 2, hidden_dim * 4),
            (hidden_dim * 4, output_size)]
    params = {}
    for i, (din, dout) in enumerate(dims, start=1):
        key, kw, kb = jax.random.split(key, 3)
        bound = 1.0 / (din ** 0.5)  # matches nn.Linear default uniform init
        params[f"w{i}"] = jax.random.uniform(
            kw, (din, dout), jnp.float32, minval=-bound, maxval=bound)
        params[f"b{i}"] = jax.random.uniform(
            kb, (1, dout), jnp.float32, minval=-bound, maxval=bound)
    return params


def reference_forward(x, params):
    h = x
    for i in range(1, 4):
        h = h @ params[f"w{i}"] + params[f"b{i}"]
        h = jnp.where(h > 0, h, 0.2 * h)
    h = h @ params["w4"] + params["b4"]
    return jnp.tanh(h)


if __name__ == "__main__":
    # Small shapes consistent with the module: latent z -> image vector.
    batch = 4
    input_size = 32      # latent dim (z_size)
    hidden_dim = 32
    output_size = 64     # flattened "image" size (784 in the original)

    key = jax.random.PRNGKey(0)
    key, kx = jax.random.split(key)
    x = jax.random.normal(kx, (batch, input_size), jnp.float32)
    params = init_params(key, input_size, hidden_dim, output_size)

    # --- exact f32 path, tiny batch (grid=1 fast path) ----------------------
    padded_f32 = pad_params(params, param_dtype=jnp.float32)
    out = jax.block_until_ready(generator_forward(x, padded_f32))
    ref = reference_forward(x, params)
    assert out.shape == (batch, output_size)
    assert jnp.allclose(out, ref, atol=2e-5, rtol=1e-5)

    # --- exact f32 path, odd batch (right-sized tile, >=2 parallel steps) ---
    key, kb = jax.random.split(key)
    xb = jax.random.normal(kb, (300, input_size), jnp.float32)
    out_b = jax.block_until_ready(generator_forward(xb, padded_f32))
    ref_b = reference_forward(xb, params)
    assert out_b.shape == (300, output_size)
    assert jnp.allclose(out_b, ref_b, atol=2e-5, rtol=1e-5)

    # --- bf16 weights + bf16 output path (halves dominant HBM streams) ------
    padded_bf16 = pad_params(params, param_dtype=jnp.bfloat16)
    key, kc = jax.random.split(key)
    xc = jax.random.normal(kc, (256, input_size), jnp.float32)
    out_c = jax.block_until_ready(
        generator_forward(xc, padded_bf16, out_dtype=jnp.bfloat16))
    ref_c = reference_forward(xc, params)
    assert out_c.shape == (256, output_size)
    assert out_c.dtype == jnp.bfloat16
    assert bool(jnp.all(jnp.isfinite(out_c.astype(jnp.float32))))
    assert bool(jnp.max(jnp.abs(out_c.astype(jnp.float32) - ref_c)) < 0.1)

    print("KERNEL_OK")
</pallas_src>

<mosaic_0001>
module attributes {stable_mosaic.version = 11 : i64} {
  func.func @generator_kernel(%arg0: i32, %arg1: memref<8x128xf32, #tpu.memory_space<vmem>>, %arg2: memref<128x128xf32, #tpu.memory_space<vmem>>, %arg3: memref<1x128xf32, #tpu.memory_space<vmem>>, %arg4: memref<128x128xf32, #tpu.memory_space<vmem>>, %arg5: memref<1x128xf32, #tpu.memory_space<vmem>>, %arg6: memref<128x128xf32, #tpu.memory_space<vmem>>, %arg7: memref<1x128xf32, #tpu.memory_space<vmem>>, %arg8: memref<128x64xf32, #tpu.memory_space<vmem>>, %arg9: memref<1x64xf32, #tpu.memory_space<vmem>>, %arg10: memref<8x64xf32, #tpu.memory_space<vmem>>) attributes {dimension_semantics = [#tpu.dimension_semantics<parallel>], iteration_bounds = array<i64: 1>, scalar_prefetch = 0 : i64, scratch_operands = 0 : i64, tpu.core_type = #tpu.core_type<tc>, window_params = [{transform_indices = @transform_0, window_bounds = array<i64: 8, 128>}, {pipeline_mode = #tpu.pipeline_mode<synchronous>, transform_indices = @transform_1, window_bounds = array<i64: 128, 128>}, {pipeline_mode = #tpu.pipeline_mode<synchronous>, transform_indices = @transform_2, window_bounds = array<i64: 1, 128>}, {pipeline_mode = #tpu.pipeline_mode<synchronous>, transform_indices = @transform_3, window_bounds = array<i64: 128, 128>}, {pipeline_mode = #tpu.pipeline_mode<synchronous>, transform_indices = @transform_4, window_bounds = array<i64: 1, 128>}, {pipeline_mode = #tpu.pipeline_mode<synchronous>, transform_indices = @transform_5, window_bounds = array<i64: 128, 128>}, {pipeline_mode = #tpu.pipeline_mode<synchronous>, transform_indices = @transform_6, window_bounds = array<i64: 1, 128>}, {pipeline_mode = #tpu.pipeline_mode<synchronous>, transform_indices = @transform_7, window_bounds = array<i64: 128, 64>}, {pipeline_mode = #tpu.pipeline_mode<synchronous>, transform_indices = @transform_8, window_bounds = array<i64: 1, 64>}, {transform_indices = @transform_9, window_bounds = array<i64: 8, 64>}]} {
    %c0 = arith.constant 0 : index
    %c0_0 = arith.constant 0 : index
    %0 = vector.load %arg3[%c0, %c0_0] : memref<1x128xf32, #tpu.memory_space<vmem>>, vector<1x128xf32>
    %c0_1 = arith.constant 0 : index
    %c0_2 = arith.constant 0 : index
    %1 = vector.load %arg5[%c0_1, %c0_2] : memref<1x128xf32, #tpu.memory_space<vmem>>, vector<1x128xf32>
    %c0_3 = arith.constant 0 : index
    %c0_4 = arith.constant 0 : index
    %2 = vector.load %arg7[%c0_3, %c0_4] : memref<1x128xf32, #tpu.memory_space<vmem>>, vector<1x128xf32>
    %c0_5 = arith.constant 0 : index
    %c0_6 = arith.constant 0 : index
    %3 = vector.load %arg9[%c0_5, %c0_6] : memref<1x64xf32, #tpu.memory_space<vmem>>, vector<1x64xf32>
    %c0_7 = arith.constant 0 : index
    %c0_8 = arith.constant 0 : index
    %4 = vector.load %arg1[%c0_7, %c0_8] : memref<8x128xf32, #tpu.memory_space<vmem>>, vector<8x128xf32>
    %c0_9 = arith.constant 0 : index
    %c0_10 = arith.constant 0 : index
    %5 = vector.load %arg2[%c0_9, %c0_10] : memref<128x128xf32, #tpu.memory_space<vmem>>, vector<128x128xf32>
    %cst = arith.constant dense<0.000000e+00> : vector<8x128xf32>
    %6 = tpu.matmul %4, %5, %cst {dimension_numbers = #tpu.dot_dimension_numbers<[1], [0], [0], [1], [0, 0, 1, 1], [], []>} : vector<8x128xf32>, vector<128x128xf32>, vector<8x128xf32> -> vector<8x128xf32>
    %7 = vector.broadcast %0 : vector<1x128xf32> to vector<8x128xf32>
    %8 = arith.addf %6, %7 : vector<8x128xf32>
    %cst_11 = arith.constant 0.000000e+00 : f32
    %9 = vector.broadcast %cst_11 : f32 to vector<8x128xf32>
    %10 = arith.cmpf ogt, %8, %9 : vector<8x128xf32>
    %cst_12 = arith.constant 2.000000e-01 : f32
    %11 = vector.broadcast %cst_12 : f32 to vector<8x128xf32>
    %12 = arith.mulf %11, %8 : vector<8x128xf32>
    %13 = arith.select %10, %8, %12 : vector<8x128xi1>, vector<8x128xf32>
    %c0_13 = arith.constant 0 : index
    %c0_14 = arith.constant 0 : index
    %14 = vector.load %arg4[%c0_13, %c0_14] : memref<128x128xf32, #tpu.memory_space<vmem>>, vector<128x128xf32>
    %cst_15 = arith.constant dense<0.000000e+00> : vector<8x128xf32>
    %15 = tpu.matmul %13, %14, %cst_15 {dimension_numbers = #tpu.dot_dimension_numbers<[1], [0], [0], [1], [0, 0, 1, 1], [], []>} : vector<8x128xf32>, vector<128x128xf32>, vector<8x128xf32> -> vector<8x128xf32>
    %16 = vector.broadcast %1 : vector<1x128xf32> to vector<8x128xf32>
    %17 = arith.addf %15, %16 : vector<8x128xf32>
    %cst_16 = arith.constant 0.000000e+00 : f32
    %18 = vector.broadcast %cst_16 : f32 to vector<8x128xf32>
    %19 = arith.cmpf ogt, %17, %18 : vector<8x128xf32>
    %cst_17 = arith.constant 2.000000e-01 : f32
    %20 = vector.broadcast %cst_17 : f32 to vector<8x128xf32>
    %21 = arith.mulf %20, %17 : vector<8x128xf32>
    %22 = arith.select %19, %17, %21 : vector<8x128xi1>, vector<8x128xf32>
    %c0_18 = arith.constant 0 : index
    %c0_19 = arith.constant 0 : index
    %23 = vector.load %arg6[%c0_18, %c0_19] : memref<128x128xf32, #tpu.memory_space<vmem>>, vector<128x128xf32>
    %cst_20 = arith.constant dense<0.000000e+00> : vector<8x128xf32>
    %24 = tpu.matmul %22, %23, %cst_20 {dimension_numbers = #tpu.dot_dimension_numbers<[1], [0], [0], [1], [0, 0, 1, 1], [], []>} : vector<8x128xf32>, vector<128x128xf32>, vector<8x128xf32> -> vector<8x128xf32>
    %25 = vector.broadcast %2 : vector<1x128xf32> to vector<8x128xf32>
    %26 = arith.addf %24, %25 : vector<8x128xf32>
    %cst_21 = arith.constant 0.000000e+00 : f32
    %27 = vector.broadcast %cst_21 : f32 to vector<8x128xf32>
    %28 = arith.cmpf ogt, %26, %27 : vector<8x128xf32>
    %cst_22 = arith.constant 2.000000e-01 : f32
    %29 = vector.broadcast %cst_22 : f32 to vector<8x128xf32>
    %30 = arith.mulf %29, %26 : vector<8x128xf32>
    %31 = arith.select %28, %26, %30 : vector<8x128xi1>, vector<8x128xf32>
    %c0_23 = arith.constant 0 : index
    %c0_24 = arith.constant 0 : index
    %32 = vector.load %arg8[%c0_23, %c0_24] : memref<128x64xf32, #tpu.memory_space<vmem>>, vector<128x64xf32>
    %cst_25 = arith.constant dense<0.000000e+00> : vector<8x64xf32>
    %33 = tpu.matmul %31, %32, %cst_25 {dimension_numbers = #tpu.dot_dimension_numbers<[1], [0], [0], [1], [0, 0, 1, 1], [], []>} : vector<8x128xf32>, vector<128x64xf32>, vector<8x64xf32> -> vector<8x64xf32>
    %34 = vector.broadcast %3 : vector<1x64xf32> to vector<8x64xf32>
    %35 = arith.addf %33, %34 : vector<8x64xf32>
    %36 = math.tanh %35 : vector<8x64xf32>
    %c0_26 = arith.constant 0 : index
    %c0_27 = arith.constant 0 : index
    %37 = vector.load %arg10[%c0_26, %c0_27] : memref<8x64xf32, #tpu.memory_space<vmem>>, vector<8x64xf32>
    tpu.vector_store %arg10[%c0_26, %c0_27], %36 {strides = array<i32>} : memref<8x64xf32, #tpu.memory_space<vmem>>, vector<8x64xf32>,
    return
  }
  func.func @transform_0(%arg0: i32) -> (i32, i32) {
    %c0_i32 = arith.constant 0 : i32
    %c0_i32_0 = arith.constant 0 : i32
    return %arg0, %c0_i32 : i32, i32
  }
  func.func @transform_1(%arg0: i32) -> (i32, i32) {
    %c0_i32 = arith.constant 0 : i32
    %c0_i32_0 = arith.constant 0 : i32
    %c0_i32_1 = arith.constant 0 : i32
    return %c0_i32, %c0_i32_0 : i32, i32
  }
  func.func @transform_2(%arg0: i32) -> (i32, i32) {
    %c0_i32 = arith.constant 0 : i32
    %c0_i32_0 = arith.constant 0 : i32
    %c0_i32_1 = arith.constant 0 : i32
    return %c0_i32, %c0_i32_0 : i32, i32
  }
  func.func @transform_3(%arg0: i32) -> (i32, i32) {
    %c0_i32 = arith.constant 0 : i32
    %c0_i32_0 = arith.constant 0 : i32
    %c0_i32_1 = arith.constant 0 : i32
    return %c0_i32, %c0_i32_0 : i32, i32
  }
  func.func @transform_4(%arg0: i32) -> (i32, i32) {
    %c0_i32 = arith.constant 0 : i32
    %c0_i32_0 = arith.constant 0 : i32
    %c0_i32_1 = arith.constant 0 : i32
    return %c0_i32, %c0_i32_0 : i32, i32
  }
  func.func @transform_5(%arg0: i32) -> (i32, i32) {
    %c0_i32 = arith.constant 0 : i32
    %c0_i32_0 = arith.constant 0 : i32
    %c0_i32_1 = arith.constant 0 : i32
    return %c0_i32, %c0_i32_0 : i32, i32
  }
  func.func @transform_6(%arg0: i32) -> (i32, i32) {
    %c0_i32 = arith.constant 0 : i32
    %c0_i32_0 = arith.constant 0 : i32
    %c0_i32_1 = arith.constant 0 : i32
    return %c0_i32, %c0_i32_0 : i32, i32
  }
  func.func @transform_7(%arg0: i32) -> (i32, i32) {
    %c0_i32 = arith.constant 0 : i32
    %c0_i32_0 = arith.constant 0 : i32
    %c0_i32_1 = arith.constant 0 : i32
    return %c0_i32, %c0_i32_0 : i32, i32
  }
  func.func @transform_8(%arg0: i32) -> (i32, i32) {
    %c0_i32 = arith.constant 0 : i32
    %c0_i32_0 = arith.constant 0 : i32
    %c0_i32_1 = arith.constant 0 : i32
    return %c0_i32, %c0_i32_0 : i32, i32
  }
  func.func @transform_9(%arg0: i32) -> (i32, i32) {
    %c0_i32 = arith.constant 0 : i32
    %c0_i32_0 = arith.constant 0 : i32
    return %arg0, %c0_i32 : i32, i32
  }
}

</mosaic_0001>

<llo_original>
// kernel: tpu_custom_call.1
$region0: #{tpu_custom_call.1}
  #allocation0 [shape = 'u32[]', space=smem, size = 0x4, offset = 0x4, fixed_abs, tag = 'smem constant byte address 0x4 - core index']
  #allocation1 [shape = 'u32[144,128]{1,0:T(1,128)}', space=vmem, size = 0x12000, scoped, tag = 'internal scratch']
  %s0 = inlined_call_operand.vmem [shape: f32[8,128], index: 0, kind: input, shape index: {}]
  %s1 = inlined_call_operand.vmem [shape: f32[128,128], index: 1, kind: input, shape index: {}]
  %s2 = inlined_call_operand.vmem [shape: f32[1,128], index: 2, kind: input, shape index: {}]
  %s3 = inlined_call_operand.hbm [shape: f32[128,128], index: 3, kind: input, shape index: {}]
  %s4 = inlined_call_operand.vmem [shape: f32[1,128], index: 4, kind: input, shape index: {}]
  %s5 = inlined_call_operand.hbm [shape: f32[128,128], index: 5, kind: input, shape index: {}]
  %s6 = inlined_call_operand.vmem [shape: f32[1,128], index: 6, kind: input, shape index: {}]
  %s7 = inlined_call_operand.vmem [shape: f32[128,64], index: 7, kind: input, shape index: {}]
  %s8 = inlined_call_operand.vmem [shape: f32[1,64], index: 8, kind: input, shape index: {}]
  %s9 = inlined_call_operand.hbm [shape: f32[8,64], index: 9, kind: output, shape index: {}]
  %s10 = sld [smem:[#allocation0]]
  $region54: #{tpu_custom_call.1} parent=0
    _
  %s12 = ssub.s32 1, %s10
  %s13 = scalar_select 0, %s12, %s10
  $region1: #{tpu_custom_call.1} parent=0
    #allocation2 [shape = 'u8[65536]{0}', space=vmem, size = 0x10000, scoped, tag = 'input window, operand 3, single buffered']
    #allocation3 [shape = 's32[1]{0}', space=sflag, size = 0x4, scoped, tag = 'scoped memory for tpu_custom_call.1']
    #allocation4 [shape = 's32[1]{0}', space=sflag, size = 0x4, scoped, tag = 'scoped memory for tpu_custom_call.1']
    #allocation5 [shape = 'u8[65536]{0}', space=vmem, size = 0x10000, scoped, tag = 'input window, operand 5, single buffered']
    #allocation6 [shape = 's32[1]{0}', space=sflag, size = 0x4, scoped, tag = 'scoped memory for tpu_custom_call.1']
    #allocation7 [shape = 'u8[4096]{0}', space=vmem, size = 0x1000, scoped, tag = 'output window, operand 0, single buffered']
    %14 = vsyncpa [#allocation3], 0
    %15 = vsyncpa [#allocation6], 0
    %16 = vsyncpa [#allocation4], 0
    // Predicated region
    $region2: #{tpu_custom_call.1} parent=1 // pred_check
      _
    $region3: #{tpu_custom_call.1} parent=1 // pred_check_branch
      %18 = sbr.rel (0) target = $region5
    $region4: #{tpu_custom_call.1} parent=1 // pred_region
      _
    $region5: #{tpu_custom_call.1} parent=1 // pred_fallthru
      _
    // Predicated region
    $region6: #{tpu_custom_call.1} parent=1 // pred_check
      _
    $region7: #{tpu_custom_call.1} parent=1 // pred_check_branch
      %20 = sbr.rel (0) target = $region9
    $region8: #{tpu_custom_call.1} parent=1 // pred_region
      _
    $region9: #{tpu_custom_call.1} parent=1 // pred_fallthru
      _
    // Predicated region
    $region10: #{tpu_custom_call.1} parent=1 // pred_check
      _
    $region11: #{tpu_custom_call.1} parent=1 // pred_check_branch
      %22 = sbr.rel (0) target = $region13
    $region12: #{tpu_custom_call.1} parent=1 // pred_region
      _
    $region13: #{tpu_custom_call.1} parent=1 // pred_fallthru
      _
    // Predicated region
    $region14: #{tpu_custom_call.1} parent=1 // pred_check
      _
    $region15: #{tpu_custom_call.1} parent=1 // pred_check_branch
      %24 = sbr.rel (0) target = $region17
    $region16: #{tpu_custom_call.1} parent=1 // pred_region
      %s26 = ssub.s32 2048, 2048
      %27 = vsyncadd [#allocation3], %s26
      %s28 = sshll.u32 [#allocation2], 4
      %s29 = int_to_ptr.vmem [resolvable:$true] %s28
      %34 = dma.hbm_to_vmem [thread:$0]  %s3, 2048, %s29, [#allocation3], 128, 128, 8
    $region17: #{tpu_custom_call.1} parent=1 // pred_fallthru
      _
    // Predicated region
    $region18: #{tpu_custom_call.1} parent=1 // pred_check
      _
    $region19: #{tpu_custom_call.1} parent=1 // pred_check_branch
      %36 = sbr.rel (0) target = $region21
    $region20: #{tpu_custom_call.1} parent=1 // pred_region
      _
    $region21: #{tpu_custom_call.1} parent=1 // pred_fallthru
      _
    // Predicated region
    $region22: #{tpu_custom_call.1} parent=1 // pred_check
      _
    $region23: #{tpu_custom_call.1} parent=1 // pred_check_branch
      %38 = sbr.rel (0) target = $region25
    $region24: #{tpu_custom_call.1} parent=1 // pred_region
      %s40 = ssub.s32 2048, 2048
      %41 = vsyncadd [#allocation6], %s40
      %s42 = sshll.u32 [#allocation5], 4
      %s43 = int_to_ptr.vmem [resolvable:$true] %s42
      %48 = dma.hbm_to_vmem [thread:$0]  %s5, 2048, %s43, [#allocation6], 128, 128, 8
    $region25: #{tpu_custom_call.1} parent=1 // pred_fallthru
      _
    // Predicated region
    $region26: #{tpu_custom_call.1} parent=1 // pred_check
      _
    $region27: #{tpu_custom_call.1} parent=1 // pred_check_branch
      %50 = sbr.rel (0) target = $region29
    $region28: #{tpu_custom_call.1} parent=1 // pred_region
      _
    $region29: #{tpu_custom_call.1} parent=1 // pred_fallthru
      _
    // Predicated region
    $region30: #{tpu_custom_call.1} parent=1 // pred_check
      _
    $region31: #{tpu_custom_call.1} parent=1 // pred_check_branch
      %52 = sbr.rel (0) target = $region33
    $region32: #{tpu_custom_call.1} parent=1 // pred_region
      _
    $region33: #{tpu_custom_call.1} parent=1 // pred_fallthru
      _
    // Predicated region
    $region34: #{tpu_custom_call.1} parent=1 // pred_check
      _
    $region35: #{tpu_custom_call.1} parent=1 // pred_check_branch
      %54 = sbr.rel (0) target = $region37
    $region36: #{tpu_custom_call.1} parent=1 // pred_region
      _
    $region37: #{tpu_custom_call.1} parent=1 // pred_fallthru
      _
    // Predicated region
    $region38: #{tpu_custom_call.1} parent=1 // pred_check
      _
    $region39: #{tpu_custom_call.1} parent=1 // pred_check_branch
      %56 = sbr.rel (0) target = $region41
    $region40: #{tpu_custom_call.1} parent=1 // pred_region
      %57 = dma.done [#allocation3], 2048
    $region41: #{tpu_custom_call.1} parent=1 // pred_fallthru
      _
    // Predicated region
    $region42: #{tpu_custom_call.1} parent=1 // pred_check
      _
    $region43: #{tpu_custom_call.1} parent=1 // pred_check_branch
      %59 = sbr.rel (0) target = $region45
    $region44: #{tpu_custom_call.1} parent=1 // pred_region
      %60 = dma.done [#allocation6], 2048
    $region45: #{tpu_custom_call.1} parent=1 // pred_fallthru
      _
    %v61 = vld [vmem:[%s2] sm:$0x1]
    %v62 = vld [vmem:[%s4] sm:$0x1]
    %v63 = vld [vmem:[%s6] sm:$0x1]
    %v64 = vld [vmem:[%s8] sm:$0x1]
    %v65 = vld [vmem:[%s0] sm:$0xff]
    %v66 = vld [vmem:[%s1] sm:$0xff]
    %v67 = vld [vmem:[%s1 + $0x8] sm:$0xff]
    %v68 = vld [vmem:[%s1 + $0x10] sm:$0xff]
    %v69 = vld [vmem:[%s1 + $0x18] sm:$0xff]
    %v70 = vld [vmem:[%s1 + $0x20] sm:$0xff]
    %v71 = vld [vmem:[%s1 + $0x28] sm:$0xff]
    %v72 = vld [vmem:[%s1 + $0x30] sm:$0xff]
    %v73 = vld [vmem:[%s1 + $0x38] sm:$0xff]
    %v74 = vld [vmem:[%s1 + $0x40] sm:$0xff]
    %v75 = vld [vmem:[%s1 + $0x48] sm:$0xff]
    %v76 = vld [vmem:[%s1 + $0x50] sm:$0xff]
    %v77 = vld [vmem:[%s1 + $0x58] sm:$0xff]
    %v78 = vld [vmem:[%s1 + $0x60] sm:$0xff]
    %v79 = vld [vmem:[%s1 + $0x68] sm:$0xff]
    %v80 = vld [vmem:[%s1 + $0x70] sm:$0xff]
    %v81 = vld [vmem:[%s1 + $0x78] sm:$0xff]
    %v83 = vlaneseq
    %v84 = vshrl.u32 %v83, 7
    %v85 = vsub.s32 0, %v84
    %v86 = vrot.slane %v61, %v85
    %88 = vmatprep.subr.mxu0 0.0
    %89 = vmatpush1.msra.mxu0 %v81
    %90 = vmatprep.subr.mxu0 0.0
    %91 = vmatpush1.msra.mxu0 %v80
    %92 = vmatprep.subr.mxu0 0.0
    %93 = vmatpush1.msra.mxu0 %v79
    %94 = vmatprep.subr.mxu0 0.0
    %95 = vmatpush1.msra.mxu0 %v78
    %96 = vmatprep.subr.mxu0 0.0
    %97 = vmatpush1.msra.mxu0 %v77
    %98 = vmatprep.subr.mxu0 0.0
    %99 = vmatpush1.msra.mxu0 %v76
    %100 = vmatprep.subr.mxu0 0.0
    %101 = vmatpush1.msra.mxu0 %v75
    %102 = vmatprep.subr.mxu0 0.0
    %103 = vmatpush1.msra.mxu0 %v74
    %104 = vmatprep.subr.mxu0 0.0
    %105 = vmatpush1.msra.mxu0 %v73
    %106 = vmatprep.subr.mxu0 0.0
    %107 = vmatpush1.msra.mxu0 %v72
    %108 = vmatprep.subr.mxu0 0.0
    %109 = vmatpush1.msra.mxu0 %v71
    %110 = vmatprep.subr.mxu0 0.0
    %111 = vmatpush1.msra.mxu0 %v70
    %112 = vmatprep.subr.mxu0 0.0
    %113 = vmatpush1.msra.mxu0 %v69
    %114 = vmatprep.subr.mxu0 0.0
    %115 = vmatpush1.msra.mxu0 %v68
    %116 = vmatprep.subr.mxu0 0.0
    %117 = vmatpush1.msra.mxu0 %v67
    %118 = vmatprep.subr.mxu0 0.0
    %119 = vmatpush1.msra.mxu0 %v66
    %120 = vmatprep.subr.mxu0 0.0
    %121 = vmatpush2.msra.mxu0 0.0
    %122 = vmatprep.subr.mxu0 0.0
    %123 = vmatpush2.msra.mxu0 0.0
    %124 = vmatprep.subr.mxu0 0.0
    %125 = vmatpush2.msra.mxu0 0.0
    %126 = vmatprep.subr.mxu0 0.0
    %127 = vmatpush2.msra.mxu0 0.0
    %128 = vmatprep.subr.mxu0 0.0
    %129 = vmatpush2.msra.mxu0 0.0
    %130 = vmatprep.subr.mxu0 0.0
    %131 = vmatpush2.msra.mxu0 0.0
    %132 = vmatprep.subr.mxu0 0.0
    %133 = vmatpush2.msra.mxu0 0.0
    %134 = vmatprep.subr.mxu0 0.0
    %135 = vmatpush2.msra.mxu0 0.0
    %136 = vmatprep.subr.mxu0 0.0
    %137 = vmatpush2.msra.mxu0 0.0
    %138 = vmatprep.subr.mxu0 0.0
    %139 = vmatpush2.msra.mxu0 0.0
    %140 = vmatprep.subr.mxu0 0.0
    %141 = vmatpush2.msra.mxu0 0.0
    %142 = vmatprep.subr.mxu0 0.0
    %143 = vmatpush2.msra.mxu0 0.0
    %144 = vmatprep.subr.mxu0 0.0
    %145 = vmatpush2.msra.mxu0 0.0
    %146 = vmatprep.subr.mxu0 0.0
    %147 = vmatpush2.msra.mxu0 0.0
    %148 = vmatprep.subr.mxu0 0.0
    %149 = vmatpush2.msra.mxu0 0.0
    %150 = vmatprep.subr.mxu0 0.0
    %151 = vmatpush2.msra.mxu0 0.0
    %152 = vmatprep.mubr.f32.mxu0 0.0
    %153 = vmatmul.mubr.f32.gmra.mxu0 %v65
    %v154 = vpop.f32.mrf.mxu0
    %v155 = vadd.f32 %v86, %v154
    %v156 = vpop.f32.mrf.mxu0
    %157 = vdwg.mxu0
    %vm158 = vcmp.gt.f32.partialorder %v155, 0.0
    %v159 = vmul.f32 %v155, 0.2
    %v160 = vsel %vm158, %v155, %v159
    %v161 = vld [vmem:[#allocation2] sm:$0xff]
    %v162 = vld [vmem:[#allocation2 + $0x8] sm:$0xff]
    %v163 = vld [vmem:[#allocation2 + $0x10] sm:$0xff]
    %v164 = vld [vmem:[#allocation2 + $0x18] sm:$0xff]
    %v165 = vld [vmem:[#allocation2 + $0x20] sm:$0xff]
    %v166 = vld [vmem:[#allocation2 + $0x28] sm:$0xff]
    %v167 = vld [vmem:[#allocation2 + $0x30] sm:$0xff]
    %v168 = vld [vmem:[#allocation2 + $0x38] sm:$0xff]
    %v169 = vld [vmem:[#allocation2 + $0x40] sm:$0xff]
    %v170 = vld [vmem:[#allocation2 + $0x48] sm:$0xff]
    %v171 = vld [vmem:[#allocation2 + $0x50] sm:$0xff]
    %v172 = vld [vmem:[#allocation2 + $0x58] sm:$0xff]
    %v173 = vld [vmem:[#allocation2 + $0x60] sm:$0xff]
    %v174 = vld [vmem:[#allocation2 + $0x68] sm:$0xff]
    %v175 = vld [vmem:[#allocation2 + $0x70] sm:$0xff]
    %v176 = vld [vmem:[#allocation2 + $0x78] sm:$0xff]
    %v178 = vlaneseq
    %v179 = vshrl.u32 %v178, 7
    %v180 = vsub.s32 0, %v179
    %v181 = vrot.slane %v62, %v180
    %183 = vmatprep.subr.mxu0 0.0
    %184 = vmatpush1.msra.mxu0 %v176
    %185 = vmatprep.subr.mxu0 0.0
    %186 = vmatpush1.msra.mxu0 %v175
    %187 = vmatprep.subr.mxu0 0.0
    %188 = vmatpush1.msra.mxu0 %v174
    %189 = vmatprep.subr.mxu0 0.0
    %190 = vmatpush1.msra.mxu0 %v173
    %191 = vmatprep.subr.mxu0 0.0
    %192 = vmatpush1.msra.mxu0 %v172
    %193 = vmatprep.subr.mxu0 0.0
    %194 = vmatpush1.msra.mxu0 %v171
    %195 = vmatprep.subr.mxu0 0.0
    %196 = vmatpush1.msra.mxu0 %v170
    %197 = vmatprep.subr.mxu0 0.0
    %198 = vmatpush1.msra.mxu0 %v169
    %199 = vmatprep.subr.mxu0 0.0
    %200 = vmatpush1.msra.mxu0 %v168
    %201 = vmatprep.subr.mxu0 0.0
    %202 = vmatpush1.msra.mxu0 %v167
    %203 = vmatprep.subr.mxu0 0.0
    %204 = vmatpush1.msra.mxu0 %v166
    %205 = vmatprep.subr.mxu0 0.0
    %206 = vmatpush1.msra.mxu0 %v165
    %207 = vmatprep.subr.mxu0 0.0
    %208 = vmatpush1.msra.mxu0 %v164
    %209 = vmatprep.subr.mxu0 0.0
    %210 = vmatpush1.msra.mxu0 %v163
    %211 = vmatprep.subr.mxu0 0.0
    %212 = vmatpush1.msra.mxu0 %v162
    %213 = vmatprep.subr.mxu0 0.0
    %214 = vmatpush1.msra.mxu0 %v161
    %215 = vmatprep.subr.mxu0 0.0
    %216 = vmatpush2.msra.mxu0 0.0
    %217 = vmatprep.subr.mxu0 0.0
    %218 = vmatpush2.msra.mxu0 0.0
    %219 = vmatprep.subr.mxu0 0.0
    %220 = vmatpush2.msra.mxu0 0.0
    %221 = vmatprep.subr.mxu0 0.0
    %222 = vmatpush2.msra.mxu0 0.0
    %223 = vmatprep.subr.mxu0 0.0
    %224 = vmatpush2.msra.mxu0 0.0
    %225 = vmatprep.subr.mxu0 0.0
    %226 = vmatpush2.msra.mxu0 0.0
    %227 = vmatprep.subr.mxu0 0.0
    %228 = vmatpush2.msra.mxu0 0.0
    %229 = vmatprep.subr.mxu0 0.0
    %230 = vmatpush2.msra.mxu0 0.0
    %231 = vmatprep.subr.mxu0 0.0
    %232 = vmatpush2.msra.mxu0 0.0
    %233 = vmatprep.subr.mxu0 0.0
    %234 = vmatpush2.msra.mxu0 0.0
    %235 = vmatprep.subr.mxu0 0.0
    %236 = vmatpush2.msra.mxu0 0.0
    %237 = vmatprep.subr.mxu0 0.0
    %238 = vmatpush2.msra.mxu0 0.0
    %239 = vmatprep.subr.mxu0 0.0
    %240 = vmatpush2.msra.mxu0 0.0
    %241 = vmatprep.subr.mxu0 0.0
    %242 = vmatpush2.msra.mxu0 0.0
    %243 = vmatprep.subr.mxu0 0.0
    %244 = vmatpush2.msra.mxu0 0.0
    %245 = vmatprep.subr.mxu0 0.0
    %246 = vmatpush2.msra.mxu0 0.0
    %247 = vmatprep.mubr.f32.mxu0 0.0
    %248 = vmatmul.mubr.f32.gmra.mxu0 %v160
    %v249 = vpop.f32.mrf.mxu0
    %v250 = vadd.f32 %v181, %v249
    %v251 = vpop.f32.mrf.mxu0
    %252 = vdwg.mxu0
    %vm253 = vcmp.gt.f32.partialorder %v250, 0.0
    %v254 = vmul.f32 %v250, 0.2
    %v255 = vsel %vm253, %v250, %v254
    %v256 = vld [vmem:[#allocation5] sm:$0xff]
    %v257 = vld [vmem:[#allocation5 + $0x8] sm:$0xff]
    %v258 = vld [vmem:[#allocation5 + $0x10] sm:$0xff]
    %v259 = vld [vmem:[#allocation5 + $0x18] sm:$0xff]
    %v260 = vld [vmem:[#allocation5 + $0x20] sm:$0xff]
    %v261 = vld [vmem:[#allocation5 + $0x28] sm:$0xff]
    %v262 = vld [vmem:[#allocation5 + $0x30] sm:$0xff]
    %v263 = vld [vmem:[#allocation5 + $0x38] sm:$0xff]
    %v264 = vld [vmem:[#allocation5 + $0x40] sm:$0xff]
    %v265 = vld [vmem:[#allocation5 + $0x48] sm:$0xff]
    %v266 = vld [vmem:[#allocation5 + $0x50] sm:$0xff]
    %v267 = vld [vmem:[#allocation5 + $0x58] sm:$0xff]
    %v268 = vld [vmem:[#allocation5 + $0x60] sm:$0xff]
    %v269 = vld [vmem:[#allocation5 + $0x68] sm:$0xff]
    %v270 = vld [vmem:[#allocation5 + $0x70] sm:$0xff]
    %v271 = vld [vmem:[#allocation5 + $0x78] sm:$0xff]
    %v273 = vlaneseq
    %v274 = vshrl.u32 %v273, 7
    %v275 = vsub.s32 0, %v274
    %v276 = vrot.slane %v63, %v275
    %278 = vmatprep.subr.mxu0 0.0
    %279 = vmatpush1.msra.mxu0 %v271
    %280 = vmatprep.subr.mxu0 0.0
    %281 = vmatpush1.msra.mxu0 %v270
    %282 = vmatprep.subr.mxu0 0.0
    %283 = vmatpush1.msra.mxu0 %v269
    %284 = vmatprep.subr.mxu0 0.0
    %285 = vmatpush1.msra.mxu0 %v268
    %286 = vmatprep.subr.mxu0 0.0
    %287 = vmatpush1.msra.mxu0 %v267
    %288 = vmatprep.subr.mxu0 0.0
    %289 = vmatpush1.msra.mxu0 %v266
    %290 = vmatprep.subr.mxu0 0.0
    %291 = vmatpush1.msra.mxu0 %v265
    %292 = vmatprep.subr.mxu0 0.0
    %293 = vmatpush1.msra.mxu0 %v264
    %294 = vmatprep.subr.mxu0 0.0
    %295 = vmatpush1.msra.mxu0 %v263
    %296 = vmatprep.subr.mxu0 0.0
    %297 = vmatpush1.msra.mxu0 %v262
    %298 = vmatprep.subr.mxu0 0.0
    %299 = vmatpush1.msra.mxu0 %v261
    %300 = vmatprep.subr.mxu0 0.0
    %301 = vmatpush1.msra.mxu0 %v260
    %302 = vmatprep.subr.mxu0 0.0
    %303 = vmatpush1.msra.mxu0 %v259
    %304 = vmatprep.subr.mxu0 0.0
    %305 = vmatpush1.msra.mxu0 %v258
    %306 = vmatprep.subr.mxu0 0.0
    %307 = vmatpush1.msra.mxu0 %v257
    %308 = vmatprep.subr.mxu0 0.0
    %309 = vmatpush1.msra.mxu0 %v256
    %310 = vmatprep.subr.mxu0 0.0
    %311 = vmatpush2.msra.mxu0 0.0
    %312 = vmatprep.subr.mxu0 0.0
    %313 = vmatpush2.msra.mxu0 0.0
    %314 = vmatprep.subr.mxu0 0.0
    %315 = vmatpush2.msra.mxu0 0.0
    %316 = vmatprep.subr.mxu0 0.0
    %317 = vmatpush2.msra.mxu0 0.0
    %318 = vmatprep.subr.mxu0 0.0
    %319 = vmatpush2.msra.mxu0 0.0
    %320 = vmatprep.subr.mxu0 0.0
    %321 = vmatpush2.msra.mxu0 0.0
    %322 = vmatprep.subr.mxu0 0.0
    %323 = vmatpush2.msra.mxu0 0.0
    %324 = vmatprep.subr.mxu0 0.0
    %325 = vmatpush2.msra.mxu0 0.0
    %326 = vmatprep.subr.mxu0 0.0
    %327 = vmatpush2.msra.mxu0 0.0
    %328 = vmatprep.subr.mxu0 0.0
    %329 = vmatpush2.msra.mxu0 0.0
    %330 = vmatprep.subr.mxu0 0.0
    %331 = vmatpush2.msra.mxu0 0.0
    %332 = vmatprep.subr.mxu0 0.0
    %333 = vmatpush2.msra.mxu0 0.0
    %334 = vmatprep.subr.mxu0 0.0
    %335 = vmatpush2.msra.mxu0 0.0
    %336 = vmatprep.subr.mxu0 0.0
    %337 = vmatpush2.msra.mxu0 0.0
    %338 = vmatprep.subr.mxu0 0.0
    %339 = vmatpush2.msra.mxu0 0.0
    %340 = vmatprep.subr.mxu0 0.0
    %341 = vmatpush2.msra.mxu0 0.0
    %342 = vmatprep.mubr.f32.mxu0 0.0
    %343 = vmatmul.mubr.f32.gmra.mxu0 %v255
    %v344 = vpop.f32.mrf.mxu0
    %v345 = vadd.f32 %v276, %v344
    %v346 = vpop.f32.mrf.mxu0
    %347 = vdwg.mxu0
    %vm348 = vcmp.gt.f32.partialorder %v345, 0.0
    %v349 = vmul.f32 %v345, 0.2
    %v350 = vsel %vm348, %v345, %v349
    %v351 = vld [vmem:[%s7] sm:$0xff]
    %v352 = vld [vmem:[%s7 + $0x8] sm:$0xff]
    %v353 = vld [vmem:[%s7 + $0x10] sm:$0xff]
    %v354 = vld [vmem:[%s7 + $0x18] sm:$0xff]
    %v355 = vld [vmem:[%s7 + $0x20] sm:$0xff]
    %v356 = vld [vmem:[%s7 + $0x28] sm:$0xff]
    %v357 = vld [vmem:[%s7 + $0x30] sm:$0xff]
    %v358 = vld [vmem:[%s7 + $0x38] sm:$0xff]
    %v359 = vld [vmem:[%s7 + $0x40] sm:$0xff]
    %v360 = vld [vmem:[%s7 + $0x48] sm:$0xff]
    %v361 = vld [vmem:[%s7 + $0x50] sm:$0xff]
    %v362 = vld [vmem:[%s7 + $0x58] sm:$0xff]
    %v363 = vld [vmem:[%s7 + $0x60] sm:$0xff]
    %v364 = vld [vmem:[%s7 + $0x68] sm:$0xff]
    %v365 = vld [vmem:[%s7 + $0x70] sm:$0xff]
    %v366 = vld [vmem:[%s7 + $0x78] sm:$0xff]
    %v368 = vlaneseq
    %v369 = vshrl.u32 %v368, 7
    %v370 = vsub.s32 0, %v369
    %v371 = vrot.slane %v64, %v370
    %373 = vmatprep.subr.mxu0 0.0
    %374 = vmatpush1.msra.mxu0 %v366
    %375 = vmatprep.subr.mxu0 0.0
    %376 = vmatpush1.msra.mxu0 %v365
    %377 = vmatprep.subr.mxu0 0.0
    %378 = vmatpush1.msra.mxu0 %v364
    %379 = vmatprep.subr.mxu0 0.0
    %380 = vmatpush1.msra.mxu0 %v363
    %381 = vmatprep.subr.mxu0 0.0
    %382 = vmatpush1.msra.mxu0 %v362
    %383 = vmatprep.subr.mxu0 0.0
    %384 = vmatpush1.msra.mxu0 %v361
    %385 = vmatprep.subr.mxu0 0.0
    %386 = vmatpush1.msra.mxu0 %v360
    %387 = vmatprep.subr.mxu0 0.0
    %388 = vmatpush1.msra.mxu0 %v359
    %389 = vmatprep.subr.mxu0 0.0
    %390 = vmatpush1.msra.mxu0 %v358
    %391 = vmatprep.subr.mxu0 0.0
    %392 = vmatpush1.msra.mxu0 %v357
    %393 = vmatprep.subr.mxu0 0.0
    %394 = vmatpush1.msra.mxu0 %v356
    %395 = vmatprep.subr.mxu0 0.0
    %396 = vmatpush1.msra.mxu0 %v355
    %397 = vmatprep.subr.mxu0 0.0
    %398 = vmatpush1.msra.mxu0 %v354
    %399 = vmatprep.subr.mxu0 0.0
    %400 = vmatpush1.msra.mxu0 %v353
    %401 = vmatprep.subr.mxu0 0.0
    %402 = vmatpush1.msra.mxu0 %v352
    %403 = vmatprep.subr.mxu0 0.0
    %404 = vmatpush1.msra.mxu0 %v351
    %405 = vmatprep.subr.mxu0 0.0
    %406 = vmatpush2.msra.mxu0 0.0
    %407 = vmatprep.subr.mxu0 0.0
    %408 = vmatpush2.msra.mxu0 0.0
    %409 = vmatprep.subr.mxu0 0.0
    %410 = vmatpush2.msra.mxu0 0.0
    %411 = vmatprep.subr.mxu0 0.0
    %412 = vmatpush2.msra.mxu0 0.0
    %413 = vmatprep.subr.mxu0 0.0
    %414 = vmatpush2.msra.mxu0 0.0
    %415 = vmatprep.subr.mxu0 0.0
    %416 = vmatpush2.msra.mxu0 0.0
    %417 = vmatprep.subr.mxu0 0.0
    %418 = vmatpush2.msra.mxu0 0.0
    %419 = vmatprep.subr.mxu0 0.0
    %420 = vmatpush2.msra.mxu0 0.0
    %421 = vmatprep.subr.mxu0 0.0
    %422 = vmatpush2.msra.mxu0 0.0
    %423 = vmatprep.subr.mxu0 0.0
    %424 = vmatpush2.msra.mxu0 0.0
    %425 = vmatprep.subr.mxu0 0.0
    %426 = vmatpush2.msra.mxu0 0.0
    %427 = vmatprep.subr.mxu0 0.0
    %428 = vmatpush2.msra.mxu0 0.0
    %429 = vmatprep.subr.mxu0 0.0
    %430 = vmatpush2.msra.mxu0 0.0
    %431 = vmatprep.subr.mxu0 0.0
    %432 = vmatpush2.msra.mxu0 0.0
    %433 = vmatprep.subr.mxu0 0.0
    %434 = vmatpush2.msra.mxu0 0.0
    %435 = vmatprep.subr.mxu0 0.0
    %436 = vmatpush2.msra.mxu0 0.0
    %437 = vmatprep.mubr.f32.mxu0 0.0
    %438 = vmatmul.mubr.f32.gmra.mxu0 %v350
    %v439 = vpop.f32.mrf.mxu0
    %v440 = vadd.f32 %v371, %v439
    %v441 = vpop.f32.mrf.mxu0
    %442 = vdwg.mxu0
    %v443 = vtanh.pop %v440
    %vm444 = vcmask 523264
    %445 = vst.msk [vmem:[#allocation7] sm:$0xff] %vm444, %v443
    // Predicated region
    $region46: #{tpu_custom_call.1} parent=1 // pred_check
      _
    $region47: #{tpu_custom_call.1} parent=1 // pred_check_branch
      %447 = sbr.rel (0) target = $region49
    $region48: #{tpu_custom_call.1} parent=1 // pred_region
      %s449 = ssub.s32 128, 128
      %450 = vsyncadd [#allocation4], %s449
      %s452 = sshll.u32 [#allocation7], 4
      %s453 = int_to_ptr.vmem [resolvable:$true] %s452
      %455 = dma.vmem_to_hbm [thread:$0]  %s453, 128, %s9, [#allocation4]
    $region49: #{tpu_custom_call.1} parent=1 // pred_fallthru
      _
    // Predicated region
    $region50: #{tpu_custom_call.1} parent=1 // pred_check
      _
    $region51: #{tpu_custom_call.1} parent=1 // pred_check_branch
      %457 = sbr.rel (0) target = $region53
    $region52: #{tpu_custom_call.1} parent=1 // pred_region
      %458 = dma.done [#allocation4], 128
    $region53: #{tpu_custom_call.1} parent=1 // pred_fallthru
      _
    %459 = vsyncpa [#allocation3], 1
    %460 = vsyncpa [#allocation6], 1
    %461 = vsyncpa [#allocation4], 1

</llo_original>
